<compile_context>
chip_gen: v5e
topology: v5e:2x2
jax: 0.10.0
libtpu: 0.0.40
codegen_flags: <defaults>
</compile_context>

<pallas_src>
import jax
import jax.numpy as jnp
from jax.experimental import pallas as pl
from jax.experimental.pallas import tpu as pltpu


# ---------------------------------------------------------------------------
# Kernels
# ---------------------------------------------------------------------------
def _transform_kernel(x_ref, f_ref, w_ref, o_ref, acc_ref):
    """T[s] = diag(f) @ (X @ wc[s]); grid = (s, i, j, k), k is the reduction."""
    k = pl.program_id(3)

    @pl.when(k == 0)
    def _():
        acc_ref[...] = jnp.zeros_like(acc_ref)

    acc_ref[...] += jnp.dot(x_ref[...], w_ref[0],
                            preferred_element_type=jnp.float32)

    @pl.when(k == pl.num_programs(3) - 1)
    def _():
        # Dropout factor applied once per output tile (epilogue), not per K step.
        o_ref[0] = (acc_ref[...] * f_ref[...]).astype(o_ref.dtype)


def _transform_kernel_nofactor(x_ref, w_ref, o_ref, acc_ref):
    """Eval-mode variant: InputDropout is the identity, no factor operand."""
    k = pl.program_id(3)

    @pl.when(k == 0)
    def _():
        acc_ref[...] = jnp.zeros_like(acc_ref)

    acc_ref[...] += jnp.dot(x_ref[...], w_ref[0],
                            preferred_element_type=jnp.float32)

    @pl.when(k == pl.num_programs(3) - 1)
    def _():
        o_ref[0] = acc_ref[...].astype(o_ref.dtype)


def _agg_kernel(nnz_ref, a_ref, t_ref, o_ref, acc_ref):
    """H = relu(sum_{s,k} A[s] @ T[s]); grid = (i, j, s, k), (s, k) reductions.

    nnz_ref (SMEM, scalar-prefetched, flat int32): 1 iff the (s, i, k) support
    block has any nonzero; all-zero blocks skip the MXU push."""
    i, s, k = pl.program_id(0), pl.program_id(2), pl.program_id(3)

    @pl.when((s == 0) & (k == 0))
    def _():
        acc_ref[...] = jnp.zeros_like(acc_ref)

    idx = (s * pl.num_programs(0) + i) * pl.num_programs(3) + k

    @pl.when(nnz_ref[idx] > 0)
    def _():
        acc_ref[...] += jnp.dot(a_ref[0], t_ref[0],
                                preferred_element_type=jnp.float32)

    @pl.when((s == pl.num_programs(2) - 1) & (k == pl.num_programs(3) - 1))
    def _():
        o_ref[...] = jnp.maximum(acc_ref[...], 0.0).astype(o_ref.dtype)


def _agg_bias_kernel(nnz_ref, a_ref, t_ref, b_ref, o_ref, acc_ref):
    """Same as _agg_kernel; matches the module's `activation(h) + bias` order."""
    i, s, k = pl.program_id(0), pl.program_id(2), pl.program_id(3)

    @pl.when((s == 0) & (k == 0))
    def _():
        acc_ref[...] = jnp.zeros_like(acc_ref)

    idx = (s * pl.num_programs(0) + i) * pl.num_programs(3) + k

    @pl.when(nnz_ref[idx] > 0)
    def _():
        acc_ref[...] += jnp.dot(a_ref[0], t_ref[0],
                                preferred_element_type=jnp.float32)

    @pl.when((s == pl.num_programs(2) - 1) & (k == pl.num_programs(3) - 1))
    def _():
        h = jnp.maximum(acc_ref[...], 0.0) + b_ref[...].astype(jnp.float32)
        o_ref[...] = h.astype(o_ref.dtype)


# ---------------------------------------------------------------------------
# Wrappers (pallas_call plumbing)
# ---------------------------------------------------------------------------
def _pick(tile, dim, quantum=128):
    """Largest block size <= tile that divides dim (prefer multiples of 128 so
    the lane dim stays dense and stores are unmasked)."""
    if dim <= tile:
        return dim
    t = (tile // quantum) * quantum
    while t >= quantum:
        if dim % t == 0:
            return t
        t -= quantum
    t = min(tile, dim)
    while t > 1 and dim % t != 0:
        t -= 1
    return t


def _compiler_params(sem, est_bytes):
    # Raise the scoped VMEM limit above the 16/32 MiB defaults when the larger
    # tiles need it; stay comfortably below v7x's 64 MiB physical VMEM.
    limit = int(min(max(2 * est_bytes, 32 << 20), 60 << 20))
    return pltpu.CompilerParams(dimension_semantics=sem, vmem_limit_bytes=limit)


def _transform(x, wc, factor=None, *, tm=256, tn=512, tk=512):
    """T[s] = diag(factor) @ (x @ wc[s])  -> (S, M, D) bf16."""
    M, K = x.shape
    S, Kw, D = wc.shape
    assert Kw == K
    tm, tn, tk = _pick(tm, M), _pick(tn, D), _pick(tk, K)
    grid = (S, M // tm, D // tn, K // tk)

    x = x.astype(jnp.bfloat16)
    wc = wc.astype(jnp.bfloat16)

    # double-buffered bf16 inputs/output + f32 accumulator scratch
    est = 2 * (tm * tk * 2 + tk * tn * 2 + tm * tn * 2 + tm * 4) + tm * tn * 4

    in_specs = [pl.BlockSpec((tm, tk), lambda s, i, j, k: (i, k))]
    args = [x]
    kernel = _transform_kernel_nofactor
    if factor is not None:
        kernel = _transform_kernel
        in_specs.append(pl.BlockSpec((tm, 1), lambda s, i, j, k: (i, 0)))
        args.append(factor.astype(jnp.float32))
    in_specs.append(pl.BlockSpec((1, tk, tn), lambda s, i, j, k: (s, k, j)))
    args.append(wc)

    return pl.pallas_call(
        kernel,
        out_shape=jax.ShapeDtypeStruct((S, M, D), jnp.bfloat16),
        grid_spec=pltpu.PrefetchScalarGridSpec(
            num_scalar_prefetch=0,
            grid=grid,
            in_specs=in_specs,
            out_specs=pl.BlockSpec((1, tm, tn), lambda s, i, j, k: (s, i, j)),
            scratch_shapes=[pltpu.VMEM((tm, tn), jnp.float32)],
        ),
        compiler_params=_compiler_params(
            ("parallel", "parallel", "parallel", "arbitrary"), est),
    )(*args)


def _aggregate(supports, t, bias=None, *, tm=256, tn=512, tk=512,
               out_dtype=jnp.float32):
    """H = relu(sum_s supports[s] @ T[s]) (+ bias)  -> (M, D)."""
    S, M, Kn = supports.shape
    St, Ks, D = t.shape
    assert St == S and Ks == Kn
    tm, tn, tk = _pick(tm, M), _pick(tn, D), _pick(tk, Kn)
    nI, nK = M // tm, Kn // tk
    grid = (nI, D // tn, S, nK)

    # Per-(s, i, k) block-nonzero table (flat int32 -> SMEM via scalar prefetch)
    # so all-zero support tiles skip the MXU push.
    blocks = supports.reshape(S, nI, tm, nK, tk)
    nnz = (jnp.max(jnp.abs(blocks), axis=(2, 4)) > 0).astype(jnp.int32).reshape(-1)
    # TODO(synk): DMA of all-zero A tiles still happens; remapping the k axis in
    # index_map to visit only nonzero column-blocks would save that HBM traffic too.

    supports = supports.astype(jnp.bfloat16)
    t = t.astype(jnp.bfloat16)

    est = 2 * (tm * tk * 2 + tk * tn * 2 + tm * tn * 4) + tm * tn * 4

    in_specs = [
        pl.BlockSpec((1, tm, tk), lambda i, j, s, k, nnz_ref: (s, i, k)),
        pl.BlockSpec((1, tk, tn), lambda i, j, s, k, nnz_ref: (s, k, j)),
    ]
    args = [supports, t]
    kernel = _agg_kernel
    if bias is not None:
        kernel = _agg_bias_kernel
        in_specs.append(pl.BlockSpec((1, tn), lambda i, j, s, k, nnz_ref: (0, j)))
        args.append(bias.reshape(1, D).astype(jnp.float32))
        est += 2 * tn * 4

    return pl.pallas_call(
        kernel,
        out_shape=jax.ShapeDtypeStruct((M, D), out_dtype),
        grid_spec=pltpu.PrefetchScalarGridSpec(
            num_scalar_prefetch=1,
            grid=grid,
            in_specs=in_specs,
            out_specs=pl.BlockSpec((tm, tn), lambda i, j, s, k, nnz_ref: (i, j)),
            scratch_shapes=[pltpu.VMEM((tm, tn), jnp.float32)],
        ),
        compiler_params=_compiler_params(
            ("parallel", "parallel", "arbitrary", "arbitrary"), est),
    )(nnz, *args)


def _dropout_factor(rand_u01, keep_prob):
    """InputDropout: floor(keep_prob + u) >= 1 w.p. keep_prob; scale by 1/keep_prob."""
    keep = jnp.floor(jnp.float32(keep_prob) + rand_u01.astype(jnp.float32)) >= 1.0
    return (keep.astype(jnp.float32) * jnp.float32(1.0 / keep_prob)).reshape(-1, 1)


def sum_gcn_encoder_forward(user_supports, item_supports, user_inputs,
                            item_inputs, weight, *, num_support, output_dim,
                            keep_prob=1.0, rand_user=None, rand_item=None,
                            bias_user=None, bias_item=None, training=True):
    """Pallas forward of SumGCNEncoder (activation = ReLU)."""
    if training:
        factor_u = _dropout_factor(rand_user, keep_prob)
        factor_v = _dropout_factor(rand_item, keep_prob)
    else:
        factor_u = factor_v = None          # identity InputDropout, no factor operand

    # Cumulative weights wc[s] = sum_{j<=s} weight[:, j*D:(j+1)*D] — tiny tensor,
    # computed in plain XLA (fused for free) instead of a dedicated kernel launch.
    K = weight.shape[0]
    wc = jnp.cumsum(
        weight.reshape(K, num_support, output_dim).astype(jnp.float32), axis=1)
    wc = jnp.transpose(wc, (1, 0, 2))                            # (S, K, D)

    tu = _transform(user_inputs, wc, factor_u)                   # (S, U, D) bf16
    tv = _transform(item_inputs, wc, factor_v)                   # (S, I, D) bf16
    user_out = _aggregate(user_supports, tv, bias_user)          # (U, D) f32
    item_out = _aggregate(item_supports, tu, bias_item)          # (I, D) f32
    return user_out, item_out


# ---------------------------------------------------------------------------
# Pure-JAX reference + demo
# ---------------------------------------------------------------------------
def _reference(user_supports, item_supports, xu, xv, weight, num_support,
               output_dim, keep_prob, rand_u, rand_v, training=True,
               bias_user=None, bias_item=None):
    if training:
        mu = (jnp.floor(keep_prob + rand_u) >= 1.0).astype(jnp.float32)[:, None]
        mv = (jnp.floor(keep_prob + rand_v) >= 1.0).astype(jnp.float32)[:, None]
        xu = xu * mu / keep_prob
        xv = xv * mv / keep_prob
    K = weight.shape[0]
    wc = jnp.cumsum(weight.reshape(K, num_support, output_dim), axis=1)
    uh = jnp.zeros((xu.shape[0], output_dim), jnp.float32)
    ih = jnp.zeros((xv.shape[0], output_dim), jnp.float32)
    for i in range(num_support):
        w = wc[:, i, :]
        uh = uh + user_supports[i] @ (xv @ w)
        ih = ih + item_supports[i] @ (xu @ w)
    uo = jnp.maximum(uh, 0.0)
    io = jnp.maximum(ih, 0.0)
    if bias_user is not None:
        uo = uo + bias_user
    if bias_item is not None:
        io = io + bias_item
    return uo, io


def _rel_err(a, b):
    return float(jnp.max(jnp.abs(a - b)) / (jnp.max(jnp.abs(b)) + 1e-6))


if __name__ == "__main__":
    num_support = 5
    input_dim = 128
    output_dim = 128
    num_users = 128
    num_items = 256
    dropout_rate = 0.2
    keep_prob = 1.0 - dropout_rate

    key = jax.random.PRNGKey(0)
    ks = jax.random.split(key, 10)

    user_inputs = jax.random.normal(ks[0], (num_users, input_dim), jnp.float32)
    item_inputs = jax.random.normal(ks[1], (num_items, input_dim), jnp.float32)
    # stand-in for the xavier_uniform_ initialised weight
    weight = jax.random.uniform(ks[2], (input_dim, output_dim * num_support),
                                jnp.float32, minval=-0.1, maxval=0.1)

    # TODO(synk): torch.sparse.mm has no generic sparse-tensor Pallas equivalent;
    # the normalised rating adjacency matrices are handled as dense (S, M, N)
    # with a per-tile nonzero table that lets the kernel skip all-zero blocks.
    user_supports = (jax.random.uniform(ks[3], (num_support, num_users, num_items), jnp.float32)
                     * (jax.random.uniform(ks[4], (num_support, num_users, num_items)) < 0.1)
                     ) / num_items
    item_supports = (jax.random.uniform(ks[5], (num_support, num_items, num_users), jnp.float32)
                     * (jax.random.uniform(ks[6], (num_support, num_items, num_users)) < 0.1)
                     ) / num_users

    rand_user = jax.random.uniform(ks[7], (num_users,), jnp.float32)   # torch.rand((U,))
    rand_item = jax.random.uniform(ks[8], (num_items,), jnp.float32)   # torch.rand((I,))

    # 1) Training-mode forward via the Pallas kernels.
    user_out, item_out = sum_gcn_encoder_forward(
        user_supports, item_supports, user_inputs, item_inputs, weight,
        num_support=num_support, output_dim=output_dim, keep_prob=keep_prob,
        rand_user=rand_user, rand_item=rand_item, training=True)
    user_out, item_out = jax.block_until_ready((user_out, item_out))

    user_ref, item_ref = _reference(
        user_supports, item_supports, user_inputs, item_inputs, weight,
        num_support, output_dim, keep_prob, rand_user, rand_item, training=True)
    assert _rel_err(user_out, user_ref) < 2e-2, "user_outputs mismatch vs reference"
    assert _rel_err(item_out, item_ref) < 2e-2, "item_outputs mismatch vs reference"

    # 2) Eval-mode forward: InputDropout is the identity (no factor operand).
    ue, ie = sum_gcn_encoder_forward(
        user_supports, item_supports, user_inputs, item_inputs, weight,
        num_support=num_support, output_dim=output_dim, keep_prob=keep_prob,
        rand_user=rand_user, rand_item=rand_item, training=False)
    ue, ie = jax.block_until_ready((ue, ie))
    ue_ref, ie_ref = _reference(
        user_supports, item_supports, user_inputs, item_inputs, weight,
        num_support, output_dim, keep_prob, rand_user, rand_item, training=False)
    assert _rel_err(ue, ue_ref) < 2e-2, "eval user_outputs mismatch"
    assert _rel_err(ie, ie_ref) < 2e-2, "eval item_outputs mismatch"

    # 3) use_bias path: module does activation(h) + bias.
    kb1, kb2 = jax.random.split(ks[9])
    bias_user = jax.random.normal(kb1, (output_dim,), jnp.float32) * 0.1
    bias_item = jax.random.normal(kb2, (output_dim,), jnp.float32) * 0.1
    ub, ib = sum_gcn_encoder_forward(
        user_supports, item_supports, user_inputs, item_inputs, weight,
        num_support=num_support, output_dim=output_dim, keep_prob=keep_prob,
        rand_user=rand_user, rand_item=rand_item,
        bias_user=bias_user, bias_item=bias_item, training=False)
    ub, ib = jax.block_until_ready((ub, ib))
    ub_ref, ib_ref = _reference(
        user_supports, item_supports, user_inputs, item_inputs, weight,
        num_support, output_dim, keep_prob, rand_user, rand_item, training=False,
        bias_user=bias_user, bias_item=bias_item)
    assert _rel_err(ub, ub_ref) < 2e-2, "bias user_outputs mismatch"
    assert _rel_err(ib, ib_ref) < 2e-2, "bias item_outputs mismatch"

    print("KERNEL_OK")
</pallas_src>

<mosaic_0001>
module attributes {stable_mosaic.version = 11 : i64} {
  func.func @_transform_kernel(%arg0: i32, %arg1: i32, %arg2: i32, %arg3: i32, %arg4: memref<128x128xbf16, #tpu.memory_space<vmem>>, %arg5: memref<128x1xf32, #tpu.memory_space<vmem>>, %arg6: memref<1x128x128xbf16, #tpu.memory_space<vmem>>, %arg7: memref<1x128x128xbf16, #tpu.memory_space<vmem>>, %arg8: memref<128x128xf32, #tpu.memory_space<vmem>>) attributes {dimension_semantics = [#tpu.dimension_semantics<parallel>, #tpu.dimension_semantics<parallel>, #tpu.dimension_semantics<parallel>, #tpu.dimension_semantics<arbitrary>], iteration_bounds = array<i64: 5, 1, 1, 1>, scalar_prefetch = 0 : i64, scratch_operands = 1 : i64, tpu.core_type = #tpu.core_type<tc>, window_params = [{transform_indices = @transform_0, window_bounds = array<i64: 128, 128>}, {transform_indices = @transform_1, window_bounds = array<i64: 128, 1>}, {transform_indices = @transform_2, window_bounds = array<i64: 1, 128, 128>}, {transform_indices = @transform_3, window_bounds = array<i64: 1, 128, 128>}]} {
    %c0_i32 = arith.constant 0 : i32
    %0 = arith.cmpi eq, %arg3, %c0_i32 : i32
    %1 = arith.extui %0 : i1 to i32
    %c0_i32_0 = arith.constant 0 : i32
    %2 = arith.cmpi ne, %1, %c0_i32_0 : i32
    scf.if %2 {
      %cst_11 = arith.constant 0.000000e+00 : f32
      %13 = vector.broadcast %cst_11 : f32 to vector<128x128xf32>
      %c0_12 = arith.constant 0 : index
      %c0_13 = arith.constant 0 : index
      %14 = vector.load %arg8[%c0_12, %c0_13] : memref<128x128xf32, #tpu.memory_space<vmem>>, vector<128x128xf32>
      tpu.vector_store %arg8[%c0_12, %c0_13], %13 {strides = array<i32>} : memref<128x128xf32, #tpu.memory_space<vmem>>, vector<128x128xf32>,
    } else {
    }
    %c0 = arith.constant 0 : index
    %c0_1 = arith.constant 0 : index
    %3 = vector.load %arg8[%c0, %c0_1] : memref<128x128xf32, #tpu.memory_space<vmem>>, vector<128x128xf32>
    %c0_2 = arith.constant 0 : index
    %c0_3 = arith.constant 0 : index
    %4 = vector.load %arg4[%c0_2, %c0_3] : memref<128x128xbf16, #tpu.memory_space<vmem>>, vector<128x128xbf16>
    %c0_4 = arith.constant 0 : index
    %c0_5 = arith.constant 0 : index
    %c0_6 = arith.constant 0 : index
    %5 = vector.load %arg6[%c0_4, %c0_5, %c0_6] : memref<1x128x128xbf16, #tpu.memory_space<vmem>>, vector<1x128x128xbf16>
    %6 = vector.shape_cast %5 : vector<1x128x128xbf16> to vector<128x128xbf16>
    %cst = arith.constant dense<0.000000e+00> : vector<128x128xf32>
    %7 = tpu.matmul %4, %6, %cst {dimension_numbers = #tpu.dot_dimension_numbers<[1], [0], [0], [1], [0, 0, 1, 1], [], []>} : vector<128x128xbf16>, vector<128x128xbf16>, vector<128x128xf32> -> vector<128x128xf32>
    %8 = arith.addf %3, %7 : vector<128x128xf32>
    %c0_7 = arith.constant 0 : index
    %c0_8 = arith.constant 0 : index
    %9 = vector.load %arg8[%c0_7, %c0_8] : memref<128x128xf32, #tpu.memory_space<vmem>>, vector<128x128xf32>
    tpu.vector_store %arg8[%c0_7, %c0_8], %8 {strides = array<i32>} : memref<128x128xf32, #tpu.memory_space<vmem>>, vector<128x128xf32>,
    %c0_i32_9 = arith.constant 0 : i32
    %10 = arith.cmpi eq, %arg3, %c0_i32_9 : i32
    %11 = arith.extui %10 : i1 to i32
    %c0_i32_10 = arith.constant 0 : i32
    %12 = arith.cmpi ne, %11, %c0_i32_10 : i32
    scf.if %12 {
      %c0_11 = arith.constant 0 : index
      %c0_12 = arith.constant 0 : index
      %13 = vector.load %arg8[%c0_11, %c0_12] : memref<128x128xf32, #tpu.memory_space<vmem>>, vector<128x128xf32>
      %c0_13 = arith.constant 0 : index
      %c0_14 = arith.constant 0 : index
      %14 = vector.load %arg5[%c0_13, %c0_14] : memref<128x1xf32, #tpu.memory_space<vmem>>, vector<128x1xf32>
      %15 = vector.broadcast %14 : vector<128x1xf32> to vector<128x128xf32>
      %16 = arith.mulf %13, %15 : vector<128x128xf32>
      %17 = arith.truncf %16 : vector<128x128xf32> to vector<128x128xbf16>
      %c0_15 = arith.constant 0 : index
      %c0_16 = arith.constant 0 : index
      %c0_17 = arith.constant 0 : index
      %18 = vector.load %arg7[%c0_15, %c0_16, %c0_17] : memref<1x128x128xbf16, #tpu.memory_space<vmem>>, vector<1x128x128xbf16>
      %19 = vector.shape_cast %18 : vector<1x128x128xbf16> to vector<128x128xbf16>
      %20 = vector.shape_cast %17 : vector<128x128xbf16> to vector<1x128x128xbf16>
      tpu.vector_store %arg7[%c0_15, %c0_16, %c0_17], %20 {strides = array<i32>} : memref<1x128x128xbf16, #tpu.memory_space<vmem>>, vector<1x128x128xbf16>,
    } else {
    }
    return
  }
  func.func @transform_0(%arg0: i32, %arg1: i32, %arg2: i32, %arg3: i32) -> (i32, i32) {
    %c0_i32 = arith.constant 0 : i32
    return %arg1, %arg3 : i32, i32
  }
  func.func @transform_1(%arg0: i32, %arg1: i32, %arg2: i32, %arg3: i32) -> (i32, i32) {
    %c0_i32 = arith.constant 0 : i32
    %c0_i32_0 = arith.constant 0 : i32
    return %arg1, %c0_i32 : i32, i32
  }
  func.func @transform_2(%arg0: i32, %arg1: i32, %arg2: i32, %arg3: i32) -> (i32, i32, i32) {
    %c0_i32 = arith.constant 0 : i32
    return %arg0, %arg3, %arg2 : i32, i32, i32
  }
  func.func @transform_3(%arg0: i32, %arg1: i32, %arg2: i32, %arg3: i32) -> (i32, i32, i32) {
    %c0_i32 = arith.constant 0 : i32
    return %arg0, %arg1, %arg2 : i32, i32, i32
  }
}

</mosaic_0001>

<llo_original>
// kernel: tpu_custom_call.1
$region0: #{tpu_custom_call.1}
  #allocation0 [shape = 'u32[]', space=smem, size = 0x4, offset = 0x4, fixed_abs, tag = 'smem constant byte address 0x4 - core index']
  #allocation1 [shape = 'u32[72,128]{1,0:T(1,128)}', space=vmem, size = 0x9000, scoped, tag = 'internal scratch']
  #allocation2 [shape = 'f32[128,128]{1,0:T(8,128)}', space=vmem, size = 0x10000, scoped, tag = 'scratch operand']
  %s0 = inlined_call_operand.vmem [shape: bf16[128,128], index: 0, kind: input, shape index: {}]
  %s1 = inlined_call_operand.vmem [shape: f32[128,1], index: 1, kind: input, shape index: {}]
  %s2 = inlined_call_operand.hbm [shape: bf16[5,128,128], index: 2, kind: input, shape index: {}]
  %s3 = inlined_call_operand.hbm [shape: bf16[5,128,128], index: 3, kind: output, shape index: {}]
  %s4 = sld [smem:[#allocation0]]
  $region57: #{tpu_custom_call.1} parent=0
    _
  %s6 = ssub.s32 1, %s4
  %s7 = scalar_select 0, %s6, %s4
  $region1: #{tpu_custom_call.1} parent=0
    #allocation3 [shape = 'u8[65536]{0}', space=vmem, size = 0x10000, scoped, tag = 'input window, operand 2']
    #allocation4 [shape = 's32[2]{0}', space=sflag, size = 0x8, scoped, tag = 'scoped memory for tpu_custom_call.1']
    #allocation5 [shape = 's32[2]{0}', space=sflag, size = 0x8, scoped, tag = 'scoped memory for tpu_custom_call.1']
    #allocation6 [shape = 'u8[65536]{0}', space=vmem, size = 0x10000, scoped, tag = 'output window, operand 0']
    %8 = vsyncpa [#allocation4], 0
    %s9 = scalar_lea.sflag [#allocation4], 1
    %10 = vsyncpa %s9, 0
    %11 = vsyncpa [#allocation5], 0
    %s12 = scalar_lea.sflag [#allocation5], 1
    %13 = vsyncpa %s12, 0
    loop: start=0, step=1, limit=7
    $region2: #{tpu_custom_call.1} parent=1 // loop_pre_header
      _
    $region3: #{tpu_custom_call.1} parent=1 // loop_header
      %s15 = sphi 0, %s19
      %p16 = scmp.ge.s32.totalorder %s15, 7
      %s22 = sphi 0, %s48
      %s23 = sphi 0, %s44
      %s24 = sphi 0, %s40
      %s25 = sphi 0, %s36
      %s26 = sphi 0, %s22
      %s27 = sphi 0, %s23
      %s28 = sphi 0, %s24
      %s29 = sphi 0, %s25
      %s30 = sphi 0, %s26
      %s31 = sphi 0, %s27
      %s32 = sphi 0, %s28
      %s33 = sphi 0, %s29
      %s53 = sphi 0, %s55
      %s56 = sphi 0, %s53
      %s57 = sphi 0, %s56
      %s73 = sphi 0, %s57
      %s79 = sphi 0, %s81
      %s82 = sphi 0, %s79
      %s83 = sphi 0, %s82
      %s99 = sphi 0, %s83
      %s109 = sphi 0, %s111
      %s112 = sphi 0, %s109
      %s113 = sphi 0, %s112
      %s129 = sphi 0, %s113
      %s139 = sphi 0, %s141
      %s142 = sphi 0, %s139
      %s143 = sphi 0, %s142
      %s159 = sphi 0, %s143
    $region4: #{tpu_custom_call.1} parent=1 // loop_header_branch
      %18 = sbr.rel (%p16) target = $region8
    $region5: #{tpu_custom_call.1} parent=1 // loop_body
      %s20 = ssub.s32 %s15, 1
      %s21 = ssub.s32 %s15, 2
      %s34 = sadd.s32 1, %s25
      %p35 = scmp.ge.s32.totalorder %s34, 1
      %s36 = scalar_select %p35, 0, %s34
      %s37 = sadd.s32 1, %s24
      %s38 = scalar_select %p35, %s37, %s24
      %p39 = scmp.ge.s32.totalorder %s38, 1
      %s40 = scalar_select %p39, 0, %s38
      %s41 = sadd.s32 1, %s23
      %s42 = scalar_select %p39, %s41, %s23
      %p43 = scmp.ge.s32.totalorder %s42, 1
      %s44 = scalar_select %p43, 0, %s42
      %s45 = sadd.s32 1, %s22
      %s46 = scalar_select %p43, %s45, %s22
      %p47 = scmp.ge.s32.totalorder %s46, 5
      %s48 = scalar_select %p47, 0, %s46
      %s49 = ssub.s32 %s23, %s44
      %s50 = ssub.s32 %s25, %s36
      %s51 = sor.u32 %s49, %s50
      %p52 = scmp.eq.s32.totalorder %s51, 0
      %s54 = sadd.s32 %s53, 1
      %s55 = scalar_select %p52, %s53, %s54
      %p58 = pneg %p52
      %p59 = scmp.eq.s32.totalorder %s15, 4
      %p60 = por %p58, %p59
      %p61 = scmp.ne.s32.totalorder %s53, %s56
      %p62 = scmp.eq.s32.totalorder %s15, 0
      %p63 = por %p61, %p62
      %p64 = scmp.ne.s32.totalorder %s53, %s56
      %p65 = scmp.eq.s32.totalorder %s20, 4
      %p66 = por %p64, %p65
      %p67 = scmp.ne.s32.totalorder %s56, %s57
      %p68 = scmp.eq.s32.totalorder %s20, 0
      %p69 = por %p67, %p68
      %p70 = scmp.ne.s32.totalorder %s56, %s57
      %p71 = scmp.eq.s32.totalorder %s21, 4
      %p72 = por %p70, %p71
      %p74 = scmp.ne.s32.totalorder %s57, %s73
      %p75 = scmp.eq.s32.totalorder %s21, 0
      %p76 = por %p74, %p75
      %s77 = ssub.s32 %s23, %s44
      %p78 = scmp.eq.s32.totalorder %s77, 0
      %s80 = sadd.s32 %s79, 1
      %s81 = scalar_select %p78, %s79, %s80
      %p84 = pneg %p78
      %p85 = scmp.eq.s32.totalorder %s15, 4
      %p86 = por %p84, %p85
      %p87 = scmp.ne.s32.totalorder %s79, %s82
      %p88 = scmp.eq.s32.totalorder %s15, 0
      %p89 = por %p87, %p88
      %p90 = scmp.ne.s32.totalorder %s79, %s82
      %p91 = scmp.eq.s32.totalorder %s20, 4
      %p92 = por %p90, %p91
      %p93 = scmp.ne.s32.totalorder %s82, %s83
      %p94 = scmp.eq.s32.totalorder %s20, 0
      %p95 = por %p93, %p94
      %p96 = scmp.ne.s32.totalorder %s82, %s83
      %p97 = scmp.eq.s32.totalorder %s21, 4
      %p98 = por %p96, %p97
      %p100 = scmp.ne.s32.totalorder %s83, %s99
      %p101 = scmp.eq.s32.totalorder %s21, 0
      %p102 = por %p100, %p101
      %s103 = ssub.s32 %s22, %s48
      %s104 = ssub.s32 %s25, %s36
      %s105 = sor.u32 %s103, %s104
      %s106 = ssub.s32 %s24, %s40
      %s107 = sor.u32 %s105, %s106
      %p108 = scmp.eq.s32.totalorder %s107, 0
      %s110 = sadd.s32 %s109, 1
      %s111 = scalar_select %p108, %s109, %s110
      %p114 = pneg %p108
      %p115 = scmp.eq.s32.totalorder %s15, 4
      %p116 = por %p114, %p115
      %p117 = scmp.ne.s32.totalorder %s109, %s112
      %p118 = scmp.eq.s32.totalorder %s15, 0
      %p119 = por %p117, %p118
      %p120 = scmp.ne.s32.totalorder %s109, %s112
      %p121 = scmp.eq.s32.totalorder %s20, 4
      %p122 = por %p120, %p121
      %p123 = scmp.ne.s32.totalorder %s112, %s113
      %p124 = scmp.eq.s32.totalorder %s20, 0
      %p125 = por %p123, %p124
      %p126 = scmp.ne.s32.totalorder %s112, %s113
      %p127 = scmp.eq.s32.totalorder %s21, 4
      %p128 = por %p126, %p127
      %p130 = scmp.ne.s32.totalorder %s113, %s129
      %p131 = scmp.eq.s32.totalorder %s21, 0
      %p132 = por %p130, %p131
      %s133 = ssub.s32 %s22, %s48
      %s134 = ssub.s32 %s23, %s44
      %s135 = sor.u32 %s133, %s134
      %s136 = ssub.s32 %s24, %s40
      %s137 = sor.u32 %s135, %s136
      %p138 = scmp.eq.s32.totalorder %s137, 0
      %s140 = sadd.s32 %s139, 1
      %s141 = scalar_select %p138, %s139, %s140
      %p144 = pneg %p138
      %p145 = scmp.eq.s32.totalorder %s15, 4
      %p146 = por %p144, %p145
      %p147 = scmp.ne.s32.totalorder %s139, %s142
      %p148 = scmp.eq.s32.totalorder %s15, 0
      %p149 = por %p147, %p148
      %p150 = scmp.ne.s32.totalorder %s139, %s142
      %p151 = scmp.eq.s32.totalorder %s20, 4
      %p152 = por %p150, %p151
      %p153 = scmp.ne.s32.totalorder %s142, %s143
      %p154 = scmp.eq.s32.totalorder %s20, 0
      %p155 = por %p153, %p154
      %p156 = scmp.ne.s32.totalorder %s142, %s143
      %p157 = scmp.eq.s32.totalorder %s21, 4
      %p158 = por %p156, %p157
      %p160 = scmp.ne.s32.totalorder %s143, %s159
      %p161 = scmp.eq.s32.totalorder %s21, 0
      %p162 = por %p160, %p161
      %p163 = scmp.le.s32.totalorder 1, %s15
      %p164 = scmp.lt.s32.totalorder %s15, 6
      %p165 = pnand %p163, %p164
      %p166 = pneg %p165
      // Predicated region
      $region9: #{tpu_custom_call.1} parent=5 // pred_check
        _
      $region10: #{tpu_custom_call.1} parent=5 // pred_check_branch
        %168 = sbr.rel (%p165) target = $region12
      $region11: #{tpu_custom_call.1} parent=5 // pred_region
        %s169 = ssub.s32 %s15, 1
        // Predicated region
        $region13: #{tpu_custom_call.1} parent=11 // pred_check
          %p170 = pneg %p69
        $region14: #{tpu_custom_call.1} parent=11 // pred_check_branch
          %172 = sbr.rel (%p170) target = $region16
        $region15: #{tpu_custom_call.1} parent=11 // pred_region
          %s173 = smul.u32 16, %s27
          %p174 = scmp.lt.s32.totalorder %s173, 15
          %s175 = scalar_select %p174, %s173, 15
          %p176 = scmp.lt.s32.totalorder %s29, 0
          %s177 = scalar_select %p176, %s29, 0
          %s178 = sadd.s32 %s177, %s175
          %s179 = smul.addr %s178, 4
          %s180 = scalar_lea.vmem %s0, %s179
          %s181 = smul.u32 16, %s27
        $region16: #{tpu_custom_call.1} parent=11 // pred_fallthru
          _
        // Predicated region
        $region17: #{tpu_custom_call.1} parent=11 // pred_check
          %p182 = pneg %p95
        $region18: #{tpu_custom_call.1} parent=11 // pred_check_branch
          %184 = sbr.rel (%p182) target = $region20
        $region19: #{tpu_custom_call.1} parent=11 // pred_region
          %s185 = smul.u32 16, %s27
          %p186 = scmp.lt.s32.totalorder %s185, 15
          %s187 = scalar_select %p186, %s185, 15
          %s188 = smul.addr %s187, 8
          %s189 = scalar_lea.vmem %s1, %s188
          %s190 = smul.u32 16, %s27
        $region20: #{tpu_custom_call.1} parent=11 // pred_fallthru
          _
      $region12: #{tpu_custom_call.1} parent=5 // pred_fallthru
        _
      %p191 = scmp.lt.s32.totalorder %s15, 5
      // Predicated region
      $region21: #{tpu_custom_call.1} parent=5 // pred_check
        %p192 = pneg %p191
      $region22: #{tpu_custom_call.1} parent=5 // pred_check_branch
        %194 = sbr.rel (%p192) target = $region24
      $region23: #{tpu_custom_call.1} parent=5 // pred_region
        // Predicated region
        $region25: #{tpu_custom_call.1} parent=23 // pred_check
          %p195 = pneg %p119
        $region26: #{tpu_custom_call.1} parent=23 // pred_check_branch
          %197 = sbr.rel (%p195) target = $region28
        $region27: #{tpu_custom_call.1} parent=23 // pred_region
          %s198 = sand.u32 %s109, 1
          %s199 = scalar_lea.sflag [#allocation4], %s198
          %s200 = sand.u32 %s109, 1
          %s201 = smul.addr %s200, 64
          %s202 = scalar_lea.vmem [#allocation3], %s201
          %s203 = smul.u32 16, %s25
          %205 = vsyncadd %s199, 0
          %s206 = sadd.s32 %s24, %s203
          %s207 = smul.addr %s22, 16
          %s208 = sadd.s32 %s206, %s207
          %s209 = smul.addr %s208, 4
          %s210 = scalar_lea.hbm %s2, %s209
          %s211 = sshll.u32 %s210, 4
          %s212 = int_to_ptr.hbm [resolvable:$true] %s211
          %s213 = sshll.u32 %s202, 4
          %s214 = int_to_ptr.vmem [resolvable:$true] %s213
          %219 = dma.hbm_to_vmem [thread:$0]  %s212, 1024, %s214, %s199, 64, 64, 4
        $region28: #{tpu_custom_call.1} parent=23 // pred_fallthru
          _
      $region24: #{tpu_custom_call.1} parent=5 // pred_fallthru
        _
      %p220 = scmp.le.s32.totalorder 1, %s15
      %p221 = scmp.lt.s32.totalorder %s15, 6
      %p222 = pnand %p220, %p221
      %p223 = pneg %p222
      // Predicated region
      $region29: #{tpu_custom_call.1} parent=5 // pred_check
        _
      $region30: #{tpu_custom_call.1} parent=5 // pred_check_branch
        %225 = sbr.rel (%p222) target = $region32
      $region31: #{tpu_custom_call.1} parent=5 // pred_region
        %s226 = ssub.s32 %s15, 1
        %s227 = sand.u32 %s112, 1
        %s228 = scalar_lea.sflag [#allocation4], %s227
        %s229 = sand.u32 %s112, 1
        %s230 = smul.addr %s229, 64
        %s231 = scalar_lea.vmem [#allocation3], %s230
        // Predicated region
        $region33: #{tpu_custom_call.1} parent=31 // pred_check
          %p232 = pneg %p125
        $region34: #{tpu_custom_call.1} parent=31 // pred_check_branch
          %234 = sbr.rel (%p232) target = $region36
        $region35: #{tpu_custom_call.1} parent=31 // pred_region
          %236 = dma.done %s228, 1024
        $region36: #{tpu_custom_call.1} parent=31 // pred_fallthru
          _
        %s237 = smul.u32 16, %s27
        %p238 = scmp.lt.s32.totalorder %s237, 15
        %s239 = scalar_select %p238, %s237, 15
        %p240 = scmp.lt.s32.totalorder %s29, 0
        %s241 = scalar_select %p240, %s29, 0
        %s242 = sadd.s32 %s241, %s239
        %s243 = smul.addr %s242, 4
        %s244 = scalar_lea.vmem %s0, %s243
        %p245 = pneg %p69
        %p246 = pneg %p66
        %s247 = smul.u32 16, %s27
        %p248 = scmp.lt.s32.totalorder %s247, 15
        %s249 = scalar_select %p248, %s247, 15
        %s250 = smul.addr %s249, 8
        %s251 = scalar_lea.vmem %s1, %s250
        %p252 = pneg %p95
        %p253 = pneg %p92
        %s254 = sand.u32 %s112, 1
        %s255 = scalar_lea.sflag [#allocation4], %s254
        %s256 = sand.u32 %s112, 1
        %s257 = smul.addr %s256, 64
        %s258 = scalar_lea.vmem [#allocation3], %s257
        %p259 = pneg %p125
        %p260 = pneg %p122
        %p261 = pneg %p155
        %p262 = pneg %p152
        %s263 = sand.u32 %s142, 1
        %s264 = scalar_lea.sflag [#allocation5], %s263
        %s265 = sand.u32 %s142, 1
        %s266 = smul.addr %s265, 64
        %s267 = scalar_lea.vmem [#allocation6], %s266
        %s268 = smul.u32 16, %s27
        %p269 = scmp.lt.s32.totalorder %s268, 15
        %s270 = scalar_select %p269, %s268, 15
        %p271 = scmp.lt.s32.totalorder %s29, 0
        %s272 = scalar_select %p271, %s29, 0
        %s273 = sadd.s32 %s272, %s270
        %s274 = smul.addr %s273, 4
        %s275 = scalar_lea.vmem %s0, %s274
        %s276 = smul.u32 16, %s27
        %s277 = smul.u32 16, %s27
        %p278 = scmp.lt.s32.totalorder %s277, 15
        %s279 = scalar_select %p278, %s277, 15
        %s280 = smul.addr %s279, 8
        %s281 = scalar_lea.vmem %s1, %s280
        %s282 = smul.u32 16, %s27
        %s283 = smul.u32 16, %s29
        %s284 = smul.u32 16, %s27
        %p285 = scmp.eq.s32.totalorder %s29, 0
        // Predicated region
        $region37: #{tpu_custom_call.1} parent=31 // pred_check
          %p286 = pneg %p285
        $region38: #{tpu_custom_call.1} parent=31 // pred_check_branch
          %288 = sbr.rel (%p286) target = $region40
        $region39: #{tpu_custom_call.1} parent=31 // pred_region
          %289 = vst [vmem:[#allocation2] sm:$0xff] 0.0
          %290 = vst [vmem:[#allocation2 + $0x8] sm:$0xff] 0.0
          %291 = vst [vmem:[#allocation2 + $0x10] sm:$0xff] 0.0
          %292 = vst [vmem:[#allocation2 + $0x18] sm:$0xff] 0.0
          %293 = vst [vmem:[#allocation2 + $0x20] sm:$0xff] 0.0
          %294 = vst [vmem:[#allocation2 + $0x28] sm:$0xff] 0.0
          %295 = vst [vmem:[#allocation2 + $0x30] sm:$0xff] 0.0
          %296 = vst [vmem:[#allocation2 + $0x38] sm:$0xff] 0.0
          %297 = vst [vmem:[#allocation2 + $0x40] sm:$0xff] 0.0
          %298 = vst [vmem:[#allocation2 + $0x48] sm:$0xff] 0.0
          %299 = vst [vmem:[#allocation2 + $0x50] sm:$0xff] 0.0
          %300 = vst [vmem:[#allocation2 + $0x58] sm:$0xff] 0.0
          %301 = vst [vmem:[#allocation2 + $0x60] sm:$0xff] 0.0
          %302 = vst [vmem:[#allocation2 + $0x68] sm:$0xff] 0.0
          %303 = vst [vmem:[#allocation2 + $0x70] sm:$0xff] 0.0
          %304 = vst [vmem:[#allocation2 + $0x78] sm:$0xff] 0.0
        $region40: #{tpu_custom_call.1} parent=31 // pred_fallthru
          _
        %v305 = vld [vmem:[#allocation2] sm:$0xff]
        %v306 = vld [vmem:[#allocation2 + $0x8] sm:$0xff]
        %v307 = vld [vmem:[#allocation2 + $0x10] sm:$0xff]
        %v308 = vld [vmem:[#allocation2 + $0x18] sm:$0xff]
        %v309 = vld [vmem:[#allocation2 + $0x20] sm:$0xff]
        %v310 = vld [vmem:[#allocation2 + $0x28] sm:$0xff]
        %v311 = vld [vmem:[#allocation2 + $0x30] sm:$0xff]
        %v312 = vld [vmem:[#allocation2 + $0x38] sm:$0xff]
        %v313 = vld [vmem:[#allocation2 + $0x40] sm:$0xff]
        %v314 = vld [vmem:[#allocation2 + $0x48] sm:$0xff]
        %v315 = vld [vmem:[#allocation2 + $0x50] sm:$0xff]
        %v316 = vld [vmem:[#allocation2 + $0x58] sm:$0xff]
        %v317 = vld [vmem:[#allocation2 + $0x60] sm:$0xff]
        %v318 = vld [vmem:[#allocation2 + $0x68] sm:$0xff]
        %v319 = vld [vmem:[#allocation2 + $0x70] sm:$0xff]
        %v320 = vld [vmem:[#allocation2 + $0x78] sm:$0xff]
        %v321 = vld [vmem:[%s275] sm:$0xf]
        %v322 = vld [vmem:[%s275 + $0x4] sm:$0xf]
        %v323 = vld [vmem:[%s275 + $0x8] sm:$0xf]
        %v324 = vld [vmem:[%s275 + $0xc] sm:$0xf]
        %v325 = vld [vmem:[%s275 + $0x10] sm:$0xf]
        %v326 = vld [vmem:[%s275 + $0x14] sm:$0xf]
        %v327 = vld [vmem:[%s275 + $0x18] sm:$0xf]
        %v328 = vld [vmem:[%s275 + $0x1c] sm:$0xf]
        %v329 = vld [vmem:[%s275 + $0x20] sm:$0xf]
        %v330 = vld [vmem:[%s275 + $0x24] sm:$0xf]
        %v331 = vld [vmem:[%s275 + $0x28] sm:$0xf]
        %v332 = vld [vmem:[%s275 + $0x2c] sm:$0xf]
        %v333 = vld [vmem:[%s275 + $0x30] sm:$0xf]
        %v334 = vld [vmem:[%s275 + $0x34] sm:$0xf]
        %v335 = vld [vmem:[%s275 + $0x38] sm:$0xf]
        %v336 = vld [vmem:[%s275 + $0x3c] sm:$0xf]
        %v337 = vld [vmem:[%s231] sm:$0xf]
        %v338 = vld [vmem:[%s231 + $0x4] sm:$0xf]
        %v339 = vld [vmem:[%s231 + $0x8] sm:$0xf]
        %v340 = vld [vmem:[%s231 + $0xc] sm:$0xf]
        %v341 = vld [vmem:[%s231 + $0x10] sm:$0xf]
        %v342 = vld [vmem:[%s231 + $0x14] sm:$0xf]
        %v343 = vld [vmem:[%s231 + $0x18] sm:$0xf]
        %v344 = vld [vmem:[%s231 + $0x1c] sm:$0xf]
        %v345 = vld [vmem:[%s231 + $0x20] sm:$0xf]
        %v346 = vld [vmem:[%s231 + $0x24] sm:$0xf]
        %v347 = vld [vmem:[%s231 + $0x28] sm:$0xf]
        %v348 = vld [vmem:[%s231 + $0x2c] sm:$0xf]
        %v349 = vld [vmem:[%s231 + $0x30] sm:$0xf]
        %v350 = vld [vmem:[%s231 + $0x34] sm:$0xf]
        %v351 = vld [vmem:[%s231 + $0x38] sm:$0xf]
        %v352 = vld [vmem:[%s231 + $0x3c] sm:$0xf]
        %v369 = vunpack.c.l.b16 %v321
        %v370 = vunpack.c.l.b16 %v322
        %v371 = vunpack.c.l.b16 %v323
        %v372 = vunpack.c.l.b16 %v324
        %v373 = vunpack.c.l.b16 %v325
        %v374 = vunpack.c.l.b16 %v326
        %v375 = vunpack.c.l.b16 %v327
        %v376 = vunpack.c.l.b16 %v328
        %v377 = vunpack.c.l.b16 %v329
        %v378 = vunpack.c.l.b16 %v330
        %v379 = vunpack.c.l.b16 %v331
        %v380 = vunpack.c.l.b16 %v332
        %v381 = vunpack.c.l.b16 %v333
        %v382 = vunpack.c.l.b16 %v334
        %v383 = vunpack.c.l.b16 %v335
        %v384 = vunpack.c.l.b16 %v336
        %v385 = vpack.c.b16 %v370, %v369
        %v386 = vpack.c.b16 %v372, %v371
        %v387 = vpack.c.b16 %v374, %v373
        %v388 = vpack.c.b16 %v376, %v375
        %v389 = vpack.c.b16 %v378, %v377
        %v390 = vpack.c.b16 %v380, %v379
        %v391 = vpack.c.b16 %v382, %v381
        %v392 = vpack.c.b16 %v384, %v383
        %v417 = vunpack.c.l.b16 %v337
        %v418 = vunpack.c.l.b16 %v338
        %v419 = vunpack.c.l.b16 %v339
        %v420 = vunpack.c.l.b16 %v340
        %v421 = vunpack.c.l.b16 %v341
        %v422 = vunpack.c.l.b16 %v342
        %v423 = vunpack.c.l.b16 %v343
        %v424 = vunpack.c.l.b16 %v344
        %v425 = vunpack.c.l.b16 %v345
        %v426 = vunpack.c.l.b16 %v346
        %v427 = vunpack.c.l.b16 %v347
        %v428 = vunpack.c.l.b16 %v348
        %v429 = vunpack.c.l.b16 %v349
        %v430 = vunpack.c.l.b16 %v350
        %v431 = vunpack.c.l.b16 %v351
        %v432 = vunpack.c.l.b16 %v352
        %v433 = vpack.c.b16 %v418, %v417
        %v434 = vpack.c.b16 %v420, %v419
        %v435 = vpack.c.b16 %v422, %v421
        %v436 = vpack.c.b16 %v424, %v423
        %v437 = vpack.c.b16 %v426, %v425
        %v438 = vpack.c.b16 %v428, %v427
        %v439 = vpack.c.b16 %v430, %v429
        %v440 = vpack.c.b16 %v432, %v431
        %449 = vmatpush.bf16.msra.mxu0 %v440
        %450 = vmatpush.bf16.msra.mxu0 %v439
        %451 = vmatpush.bf16.msra.mxu0 %v438
        %452 = vmatpush.bf16.msra.mxu0 %v437
        %453 = vmatpush.bf16.msra.mxu0 %v436
        %454 = vmatpush.bf16.msra.mxu0 %v435
        %455 = vmatpush.bf16.msra.mxu0 %v434
        %456 = vmatpush.bf16.msra.mxu0 %v433
        %457 = vmatmul.bf16.gmra.mxu0 %v385
        %v458 = vpop.f32.mrf.mxu0
        %v459 = vadd.f32 0.0, %v458
        %v460 = vpop.f32.mrf.mxu0
        %v461 = vadd.f32 0.0, %v460
        %462 = vmatmul.bf16.gmra.mxu0 %v386
        %v463 = vpop.f32.mrf.mxu0
        %v464 = vadd.f32 0.0, %v463
        %v465 = vpop.f32.mrf.mxu0
        %v466 = vadd.f32 0.0, %v465
        %467 = vmatmul.bf16.gmra.mxu0 %v387
        %v468 = vpop.f32.mrf.mxu0
        %v469 = vadd.f32 0.0, %v468
        %v470 = vpop.f32.mrf.mxu0
        %v471 = vadd.f32 0.0, %v470
        %472 = vmatmul.bf16.gmra.mxu0 %v388
        %v473 = vpop.f32.mrf.mxu0
        %v474 = vadd.f32 0.0, %v473
        %v475 = vpop.f32.mrf.mxu0
        %v476 = vadd.f32 0.0, %v475
        %477 = vmatmul.bf16.gmra.mxu0 %v389
        %v478 = vpop.f32.mrf.mxu0
        %v479 = vadd.f32 0.0, %v478
        %v480 = vpop.f32.mrf.mxu0
        %v481 = vadd.f32 0.0, %v480
        %482 = vmatmul.bf16.gmra.mxu0 %v390
        %v483 = vpop.f32.mrf.mxu0
        %v484 = vadd.f32 0.0, %v483
        %v485 = vpop.f32.mrf.mxu0
        %v486 = vadd.f32 0.0, %v485
        %487 = vmatmul.bf16.gmra.mxu0 %v391
        %v488 = vpop.f32.mrf.mxu0
        %v489 = vadd.f32 0.0, %v488
        %v490 = vpop.f32.mrf.mxu0
        %v491 = vadd.f32 0.0, %v490
        %492 = vmatmul.bf16.gmra.mxu0 %v392
        %v493 = vpop.f32.mrf.mxu0
        %v494 = vadd.f32 0.0, %v493
        %v495 = vpop.f32.mrf.mxu0
        %v496 = vadd.f32 0.0, %v495
        %497 = vdwg.mxu0
        %v498 = vadd.f32 %v305, %v459
        %v499 = vadd.f32 %v306, %v461
        %v500 = vadd.f32 %v307, %v464
        %v501 = vadd.f32 %v308, %v466
        %v502 = vadd.f32 %v309, %v469
        %v503 = vadd.f32 %v310, %v471
        %v504 = vadd.f32 %v311, %v474
        %v505 = vadd.f32 %v312, %v476
        %v506 = vadd.f32 %v313, %v479
        %v507 = vadd.f32 %v314, %v481
        %v508 = vadd.f32 %v315, %v484
        %v509 = vadd.f32 %v316, %v486
        %v510 = vadd.f32 %v317, %v489
        %v511 = vadd.f32 %v318, %v491
        %v512 = vadd.f32 %v319, %v494
        %v513 = vadd.f32 %v320, %v496
        %514 = vst [vmem:[#allocation2] sm:$0xff] %v498
        %515 = vst [vmem:[#allocation2 + $0x8] sm:$0xff] %v499
        %516 = vst [vmem:[#allocation2 + $0x10] sm:$0xff] %v500
        %517 = vst [vmem:[#allocation2 + $0x18] sm:$0xff] %v501
        %518 = vst [vmem:[#allocation2 + $0x20] sm:$0xff] %v502
        %519 = vst [vmem:[#allocation2 + $0x28] sm:$0xff] %v503
        %520 = vst [vmem:[#allocation2 + $0x30] sm:$0xff] %v504
        %521 = vst [vmem:[#allocation2 + $0x38] sm:$0xff] %v505
        %522 = vst [vmem:[#allocation2 + $0x40] sm:$0xff] %v506
        %523 = vst [vmem:[#allocation2 + $0x48] sm:$0xff] %v507
        %524 = vst [vmem:[#allocation2 + $0x50] sm:$0xff] %v508
        %525 = vst [vmem:[#allocation2 + $0x58] sm:$0xff] %v509
        %526 = vst [vmem:[#allocation2 + $0x60] sm:$0xff] %v510
        %527 = vst [vmem:[#allocation2 + $0x68] sm:$0xff] %v511
        %528 = vst [vmem:[#allocation2 + $0x70] sm:$0xff] %v512
        %529 = vst [vmem:[#allocation2 + $0x78] sm:$0xff] %v513
        // Predicated region
        $region41: #{tpu_custom_call.1} parent=31 // pred_check
          %p530 = pneg %p285
        $region42: #{tpu_custom_call.1} parent=31 // pred_check_branch
          %532 = sbr.rel (%p530) target = $region44
        $region43: #{tpu_custom_call.1} parent=31 // pred_region
          %v533 = vld [vmem:[#allocation2] sm:$0xff]
          %v534 = vld [vmem:[#allocation2 + $0x8] sm:$0xff]
          %v535 = vld [vmem:[#allocation2 + $0x10] sm:$0xff]
          %v536 = vld [vmem:[#allocation2 + $0x18] sm:$0xff]
          %v537 = vld [vmem:[#allocation2 + $0x20] sm:$0xff]
          %v538 = vld [vmem:[#allocation2 + $0x28] sm:$0xff]
          %v539 = vld [vmem:[#allocation2 + $0x30] sm:$0xff]
          %v540 = vld [vmem:[#allocation2 + $0x38] sm:$0xff]
          %v541 = vld [vmem:[#allocation2 + $0x40] sm:$0xff]
          %v542 = vld [vmem:[#allocation2 + $0x48] sm:$0xff]
          %v543 = vld [vmem:[#allocation2 + $0x50] sm:$0xff]
          %v544 = vld [vmem:[#allocation2 + $0x58] sm:$0xff]
          %v545 = vld [vmem:[#allocation2 + $0x60] sm:$0xff]
          %v546 = vld [vmem:[#allocation2 + $0x68] sm:$0xff]
          %v547 = vld [vmem:[#allocation2 + $0x70] sm:$0xff]
          %v548 = vld [vmem:[#allocation2 + $0x78] sm:$0xff]
          %v549 = vld [vmem:[%s281] sm:$0xff]
          %v550 = vld [vmem:[%s281 + $0x8] sm:$0xff]
          %v551 = vld [vmem:[%s281 + $0x10] sm:$0xff]
          %v552 = vld [vmem:[%s281 + $0x18] sm:$0xff]
          %v553 = vld [vmem:[%s281 + $0x20] sm:$0xff]
          %v554 = vld [vmem:[%s281 + $0x28] sm:$0xff]
          %v555 = vld [vmem:[%s281 + $0x30] sm:$0xff]
          %v556 = vld [vmem:[%s281 + $0x38] sm:$0xff]
          %v557 = vld [vmem:[%s281 + $0x40] sm:$0xff]
          %v558 = vld [vmem:[%s281 + $0x48] sm:$0xff]
          %v559 = vld [vmem:[%s281 + $0x50] sm:$0xff]
          %v560 = vld [vmem:[%s281 + $0x58] sm:$0xff]
          %v561 = vld [vmem:[%s281 + $0x60] sm:$0xff]
          %v562 = vld [vmem:[%s281 + $0x68] sm:$0xff]
          %v563 = vld [vmem:[%s281 + $0x70] sm:$0xff]
          %v564 = vld [vmem:[%s281 + $0x78] sm:$0xff]
          %566 = vset.pattern.permute.xlu0 0
          %567 = vperm.xlu0 %566, %v549
          %v568 = vpop.permute.xlu0 %567
          %571 = vset.pattern.permute.xlu0 0
          %572 = vperm.xlu0 %571, %v550
          %v573 = vpop.permute.xlu0 %572
          %576 = vset.pattern.permute.xlu0 0
          %577 = vperm.xlu0 %576, %v551
          %v578 = vpop.permute.xlu0 %577
          %581 = vset.pattern.permute.xlu0 0
          %582 = vperm.xlu0 %581, %v552
          %v583 = vpop.permute.xlu0 %582
          %586 = vset.pattern.permute.xlu0 0
          %587 = vperm.xlu0 %586, %v553
          %v588 = vpop.permute.xlu0 %587
          %591 = vset.pattern.permute.xlu0 0
          %592 = vperm.xlu0 %591, %v554
          %v593 = vpop.permute.xlu0 %592
          %596 = vset.pattern.permute.xlu0 0
          %597 = vperm.xlu0 %596, %v555
          %v598 = vpop.permute.xlu0 %597
          %601 = vset.pattern.permute.xlu0 0
          %602 = vperm.xlu0 %601, %v556
          %v603 = vpop.permute.xlu0 %602
          %606 = vset.pattern.permute.xlu0 0
          %607 = vperm.xlu0 %606, %v557
          %v608 = vpop.permute.xlu0 %607
          %611 = vset.pattern.permute.xlu0 0
          %612 = vperm.xlu0 %611, %v558
          %v613 = vpop.permute.xlu0 %612
          %616 = vset.pattern.permute.xlu0 0
          %617 = vperm.xlu0 %616, %v559
          %v618 = vpop.permute.xlu0 %617
          %621 = vset.pattern.permute.xlu0 0
          %622 = vperm.xlu0 %621, %v560
          %v623 = vpop.permute.xlu0 %622
          %626 = vset.pattern.permute.xlu0 0
          %627 = vperm.xlu0 %626, %v561
          %v628 = vpop.permute.xlu0 %627
          %631 = vset.pattern.permute.xlu0 0
          %632 = vperm.xlu0 %631, %v562
          %v633 = vpop.permute.xlu0 %632
          %636 = vset.pattern.permute.xlu0 0
          %637 = vperm.xlu0 %636, %v563
          %v638 = vpop.permute.xlu0 %637
          %641 = vset.pattern.permute.xlu0 0
          %642 = vperm.xlu0 %641, %v564
          %v643 = vpop.permute.xlu0 %642
          %v645 = vmul.f32 %v533, %v568
          %v646 = vmul.f32 %v534, %v573
          %v647 = vmul.f32 %v535, %v578
          %v648 = vmul.f32 %v536, %v583
          %v649 = vmul.f32 %v537, %v588
          %v650 = vmul.f32 %v538, %v593
          %v651 = vmul.f32 %v539, %v598
          %v652 = vmul.f32 %v540, %v603
          %v653 = vmul.f32 %v541, %v608
          %v654 = vmul.f32 %v542, %v613
          %v655 = vmul.f32 %v543, %v618
          %v656 = vmul.f32 %v544, %v623
          %v657 = vmul.f32 %v545, %v628
          %v658 = vmul.f32 %v546, %v633
          %v659 = vmul.f32 %v547, %v638
          %v660 = vmul.f32 %v548, %v643
          %v661 = vpack.c.bf16 %v645, %v645
          %v662 = vpack.c.bf16 %v646, %v646
          %v663 = vpack.c.bf16 %v647, %v647
          %v664 = vpack.c.bf16 %v648, %v648
          %v665 = vpack.c.bf16 %v649, %v649
          %v666 = vpack.c.bf16 %v650, %v650
          %v667 = vpack.c.bf16 %v651, %v651
          %v668 = vpack.c.bf16 %v652, %v652
          %v669 = vpack.c.bf16 %v653, %v653
          %v670 = vpack.c.bf16 %v654, %v654
          %v671 = vpack.c.bf16 %v655, %v655
          %v672 = vpack.c.bf16 %v656, %v656
          %v673 = vpack.c.bf16 %v657, %v657
          %v674 = vpack.c.bf16 %v658, %v658
          %v675 = vpack.c.bf16 %v659, %v659
          %v676 = vpack.c.bf16 %v660, %v660
          %677 = vst [vmem:[%s267] sm:$0xf] %v661
          %678 = vst [vmem:[%s267 + $0x4] sm:$0xf] %v662
          %679 = vst [vmem:[%s267 + $0x8] sm:$0xf] %v663
          %680 = vst [vmem:[%s267 + $0xc] sm:$0xf] %v664
          %681 = vst [vmem:[%s267 + $0x10] sm:$0xf] %v665
          %682 = vst [vmem:[%s267 + $0x14] sm:$0xf] %v666
          %683 = vst [vmem:[%s267 + $0x18] sm:$0xf] %v667
          %684 = vst [vmem:[%s267 + $0x1c] sm:$0xf] %v668
          %685 = vst [vmem:[%s267 + $0x20] sm:$0xf] %v669
          %686 = vst [vmem:[%s267 + $0x24] sm:$0xf] %v670
          %687 = vst [vmem:[%s267 + $0x28] sm:$0xf] %v671
          %688 = vst [vmem:[%s267 + $0x2c] sm:$0xf] %v672
          %689 = vst [vmem:[%s267 + $0x30] sm:$0xf] %v673
          %690 = vst [vmem:[%s267 + $0x34] sm:$0xf] %v674
          %691 = vst [vmem:[%s267 + $0x38] sm:$0xf] %v675
          %692 = vst [vmem:[%s267 + $0x3c] sm:$0xf] %v676
        $region44: #{tpu_custom_call.1} parent=31 // pred_fallthru
          _
        %s693 = sand.u32 %s142, 1
        %s694 = scalar_lea.sflag [#allocation5], %s693
        %s695 = sand.u32 %s142, 1
        %s696 = smul.addr %s695, 64
        %s697 = scalar_lea.vmem [#allocation6], %s696
        // Predicated region
        $region45: #{tpu_custom_call.1} parent=31 // pred_check
          %p698 = pneg %p152
        $region46: #{tpu_custom_call.1} parent=31 // pred_check_branch
          %700 = sbr.rel (%p698) target = $region48
        $region47: #{tpu_custom_call.1} parent=31 // pred_region
          %s701 = smul.u32 16, %s27
          %703 = vsyncadd %s694, 0
          %s704 = sadd.s32 %s28, %s701
          %s705 = smul.addr %s26, 16
          %s706 = sadd.s32 %s704, %s705
          %s707 = smul.addr %s706, 4
          %s708 = scalar_lea.hbm %s3, %s707
          %s709 = sshll.u32 %s697, 4
          %s710 = int_to_ptr.vmem [resolvable:$true] %s709
          %s711 = sshll.u32 %s708, 4
          %s712 = int_to_ptr.hbm [resolvable:$true] %s711
          %717 = dma.vmem_to_hbm [thread:$0]  %s710, 1024, %s712, %s694, 64, 64, 4
        $region48: #{tpu_custom_call.1} parent=31 // pred_fallthru
          _
      $region32: #{tpu_custom_call.1} parent=5 // pred_fallthru
        _
      %p718 = scmp.le.s32.totalorder 2, %s15
      // Predicated region
      $region49: #{tpu_custom_call.1} parent=5 // pred_check
        %p719 = pneg %p718
      $region50: #{tpu_custom_call.1} parent=5 // pred_check_branch
        %721 = sbr.rel (%p719) target = $region52
      $region51: #{tpu_custom_call.1} parent=5 // pred_region
        %s722 = ssub.s32 %s15, 2
        // Predicated region
        $region53: #{tpu_custom_call.1} parent=51 // pred_check
          %p723 = pneg %p158
        $region54: #{tpu_custom_call.1} parent=51 // pred_check_branch
          %725 = sbr.rel (%p723) target = $region56
        $region55: #{tpu_custom_call.1} parent=51 // pred_region
          %s726 = sand.u32 %s143, 1
          %s727 = scalar_lea.sflag [#allocation5], %s726
          %s728 = sand.u32 %s143, 1
          %s729 = smul.addr %s728, 64
          %s730 = scalar_lea.vmem [#allocation6], %s729
          %732 = dma.done %s727, 1024
        $region56: #{tpu_custom_call.1} parent=51 // pred_fallthru
          _
      $region52: #{tpu_custom_call.1} parent=5 // pred_fallthru
        _
    $region6: #{tpu_custom_call.1} parent=1 // loop_footer
      %s19 = sadd.s32 1, %s15
    $region7: #{tpu_custom_call.1} parent=1 // loop_footer_branch
      %14 = sbr.rel target = $region3
    $region8: #{tpu_custom_call.1} parent=1 // loop_exit
      _
    %733 = vsyncpa [#allocation4], 1
    %s734 = scalar_lea.sflag [#allocation4], 1
    %735 = vsyncpa %s734, 1
    %736 = vsyncpa [#allocation5], 1
    %s737 = scalar_lea.sflag [#allocation5], 1
    %738 = vsyncpa %s737, 1

</llo_original>
